<compile_context>
chip_gen: v5e
topology: v5e:2x2
jax: 0.10.0
libtpu: 0.0.40
codegen_flags: <defaults>
</compile_context>

<pallas_src>
import functools

import jax
import jax.numpy as jnp
from jax import lax
from jax.experimental import pallas as pl
from jax.experimental.pallas import tpu as pltpu


def _masked_ce_kernel(logits_ref, target_ref, mask_ref, weight_ref, out_ref,
                      *, batch, block_rows):
    x = logits_ref[...].astype(jnp.float32)      # (TB, C) upcast (bf16 inputs OK)
    tgt = target_ref[...]                        # (TB, 1) int32
    msk = mask_ref[...]                          # (TB, 1) f32 (0.0 = dropped row)
    w = weight_ref[...].astype(jnp.float32)      # (1, C)

    tb, c = x.shape
    col = lax.broadcasted_iota(jnp.int32, (tb, c), 1)
    sel = col == tgt                             # (TB, C) bool one-hot of target

    row_max = jnp.max(x, axis=1, keepdims=True)                         # (TB, 1)
    shifted = x - row_max                                               # (TB, C)
    sum_exp = jnp.sum(jnp.exp(shifted), axis=1, keepdims=True)          # (TB, 1)
    shifted_t = jnp.sum(jnp.where(sel, shifted, 0.0), axis=1, keepdims=True)
    nll = jnp.log(sum_exp) - shifted_t           # == logsumexp(x) - x[target]
    w_t = jnp.sum(jnp.where(sel, w, 0.0), axis=1, keepdims=True)        # w[t_i]

    # Rows past the true batch (ragged last tile) may hold unspecified VMEM data
    # (possibly NaN); gate with where() so nothing leaks into the partial sums.
    row0 = pl.program_id(0) * block_rows
    row_idx = row0 + lax.broadcasted_iota(jnp.int32, (tb, 1), 0)
    keep = jnp.logical_and(row_idx < batch, msk != 0.0)                 # (TB, 1)

    num = jnp.sum(jnp.where(keep, w_t * nll, 0.0))   # partial numerator
    den = jnp.sum(jnp.where(keep, w_t, 0.0))         # partial denominator

    # Lane-dense partial output: row 0 = num (all 128 lanes), row 1 = den.
    row = lax.broadcasted_iota(jnp.int32, (2, 128), 0)
    out_ref[...] = jnp.where(row == 0, num, den)[None]


def _choose_block_rows(b, c, itemsize, *, target_tile_bytes=8 * 1024 * 1024,
                       max_rows=4096):
    # Size against the lane-padded VMEM footprint (last dim pads to 128 lanes).
    c_pad = ((c + 127) // 128) * 128
    rows = max(1, target_tile_bytes // max(c_pad * itemsize, 1))
    rows = max(8, min(rows, max_rows))
    rows = (rows // 8) * 8                       # sublane alignment
    b8 = ((b + 7) // 8) * 8
    return max(8, min(rows, b8))


@functools.partial(jax.jit, static_argnames=("reduction", "block_rows"))
def masked_cross_entropy_loss(logits, target, mask, weight, reduction="mean",
                              block_rows=None):
    """logits: (B, C) f32/bf16; target: (B,) int; mask: (B,) bool; weight: (C,) f32."""
    if reduction not in ("mean", "sum"):
        # TODO(synk): reduction='none' has a data-dependent output shape
        # (number of kept rows) and is not implemented.
        raise NotImplementedError("only reduction in {'mean','sum'} is supported")
    # TODO(synk): the module's all-zero-mask ValueError needs a host sync and breaks
    # jit; with an all-zero mask this implementation returns NaN (0/0) for 'mean'.

    b, c = logits.shape
    if block_rows is None:
        tb = _choose_block_rows(b, c, jnp.dtype(logits.dtype).itemsize)
    else:
        tb = max(8, (int(block_rows) // 8) * 8)

    num_tiles = pl.cdiv(b, tb)

    tgt2d = target.astype(jnp.int32).reshape(b, 1)
    msk2d = mask.astype(jnp.float32).reshape(b, 1)
    w2d = weight.astype(jnp.float32).reshape(1, c)

    kernel = functools.partial(_masked_ce_kernel, batch=b, block_rows=tb)

    partials = pl.pallas_call(
        kernel,
        out_shape=jax.ShapeDtypeStruct((num_tiles, 2, 128), jnp.float32),
        grid_spec=pltpu.PrefetchScalarGridSpec(
            num_scalar_prefetch=0,
            grid=(num_tiles,),
            in_specs=[
                pl.BlockSpec((tb, c), lambda i: (i, 0)),   # logits (pipelined over batch)
                pl.BlockSpec((tb, 1), lambda i: (i, 0)),   # target
                pl.BlockSpec((tb, 1), lambda i: (i, 0)),   # mask
                pl.BlockSpec((1, c), lambda i: (0, 0)),    # weight (DMA'd once, stays resident)
            ],
            out_specs=pl.BlockSpec((1, 2, 128), lambda i: (i, 0, 0)),
        ),
        compiler_params=pltpu.CompilerParams(
            dimension_semantics=("parallel",),             # independent tiles -> megacore
            vmem_limit_bytes=48 * 1024 * 1024,             # > default scoped limit, < v7x 64 MiB
        ),
    )(logits, tgt2d, msk2d, w2d)

    num = jnp.sum(partials[:, 0, 0])
    den = jnp.sum(partials[:, 1, 0])
    if reduction == "sum":
        return num
    return num / den


def _reference(logits, target, mask, weight):
    """Pure-JAX reference mirroring torch masked_select + F.cross_entropy(weight=...)."""
    keep = mask != 0
    x = logits[keep].astype(jnp.float32)
    t = target[keep]
    lse = jax.scipy.special.logsumexp(x, axis=1)
    nll = lse - x[jnp.arange(x.shape[0]), t]
    w_t = weight[t].astype(jnp.float32)
    return jnp.sum(w_t * nll) / jnp.sum(w_t)


if __name__ == "__main__":
    key = jax.random.PRNGKey(0)
    k1, k2, k3, k4 = jax.random.split(key, 4)

    # Case 1: small single-tile batch.
    B, C = 8, 16
    logits = jax.random.normal(k1, (B, C), dtype=jnp.float32)
    target = jax.random.randint(k2, (B,), 0, C, dtype=jnp.int32)
    mask = jax.random.bernoulli(k3, 0.6, (B,))
    mask = mask.at[0].set(True)  # ensure at least one kept row (deterministic)
    weight = jax.random.uniform(k4, (C,), dtype=jnp.float32, minval=0.5, maxval=1.5)

    loss = jax.block_until_ready(masked_cross_entropy_loss(logits, target, mask, weight))
    ref = _reference(logits, target, mask, weight)
    assert jnp.allclose(loss, ref, rtol=1e-5, atol=1e-5), (loss, ref)

    # Case 2: multi-tile grid with a ragged last tile handled in-kernel
    # (B=20, tile=8 -> 3 tiles, rows 20..23 are invalid), no jnp.pad of logits.
    B2, C2 = 20, 16
    k5, k6, k7 = jax.random.split(k4, 3)
    logits2 = jax.random.normal(k5, (B2, C2), dtype=jnp.float32)
    target2 = jax.random.randint(k6, (B2,), 0, C2, dtype=jnp.int32)
    mask2 = jax.random.bernoulli(k7, 0.5, (B2,)).at[0].set(True)
    loss2 = jax.block_until_ready(
        masked_cross_entropy_loss(logits2, target2, mask2, weight, block_rows=8))
    ref2 = _reference(logits2, target2, mask2, weight)
    assert jnp.allclose(loss2, ref2, rtol=1e-5, atol=1e-5), (loss2, ref2)

    # Case 3: bf16 logits in HBM (half the DMA bytes), f32 accumulation in-kernel.
    loss_bf16 = jax.block_until_ready(
        masked_cross_entropy_loss(logits.astype(jnp.bfloat16), target, mask, weight))
    ref_bf16 = _reference(logits.astype(jnp.bfloat16), target, mask, weight)
    assert jnp.allclose(loss_bf16, ref_bf16, rtol=1e-2, atol=1e-2), (loss_bf16, ref_bf16)

    # Case 4: reduction='sum' (un-normalized weighted NLL sum).
    loss_sum = jax.block_until_ready(
        masked_cross_entropy_loss(logits, target, mask, weight, reduction="sum"))
    keep = mask != 0
    ref_sum = jnp.sum(weight[target[keep]] *
                      (jax.scipy.special.logsumexp(logits[keep], axis=1)
                       - logits[keep][jnp.arange(int(keep.sum())), target[keep]]))
    assert jnp.allclose(loss_sum, ref_sum, rtol=1e-5, atol=1e-5), (loss_sum, ref_sum)

    print("KERNEL_OK")
</pallas_src>

<mosaic_0001>
module attributes {stable_mosaic.version = 11 : i64} {
  func.func @_masked_ce_kernel(%arg0: i32, %arg1: memref<8x16xf32, #tpu.memory_space<vmem>>, %arg2: memref<8x1xi32, #tpu.memory_space<vmem>>, %arg3: memref<8x1xf32, #tpu.memory_space<vmem>>, %arg4: memref<1x16xf32, #tpu.memory_space<vmem>>, %arg5: memref<1x2x128xf32, #tpu.memory_space<vmem>>) attributes {dimension_semantics = [#tpu.dimension_semantics<parallel>], iteration_bounds = array<i64: 1>, scalar_prefetch = 0 : i64, scratch_operands = 0 : i64, tpu.core_type = #tpu.core_type<tc>, window_params = [{transform_indices = @transform_0, window_bounds = array<i64: 8, 16>}, {transform_indices = @transform_1, window_bounds = array<i64: 8, 1>}, {transform_indices = @transform_2, window_bounds = array<i64: 8, 1>}, {pipeline_mode = #tpu.pipeline_mode<synchronous>, transform_indices = @transform_3, window_bounds = array<i64: 1, 16>}, {transform_indices = @transform_4, window_bounds = array<i64: 1, 2, 128>}]} {
    %c0 = arith.constant 0 : index
    %c0_0 = arith.constant 0 : index
    %0 = vector.load %arg1[%c0, %c0_0] : memref<8x16xf32, #tpu.memory_space<vmem>>, vector<8x16xf32>
    %c0_1 = arith.constant 0 : index
    %c0_2 = arith.constant 0 : index
    %1 = vector.load %arg2[%c0_1, %c0_2] : memref<8x1xi32, #tpu.memory_space<vmem>>, vector<8x1xi32>
    %c0_3 = arith.constant 0 : index
    %c0_4 = arith.constant 0 : index
    %2 = vector.load %arg3[%c0_3, %c0_4] : memref<8x1xf32, #tpu.memory_space<vmem>>, vector<8x1xf32>
    %c0_5 = arith.constant 0 : index
    %c0_6 = arith.constant 0 : index
    %3 = vector.load %arg4[%c0_5, %c0_6] : memref<1x16xf32, #tpu.memory_space<vmem>>, vector<1x16xf32>
    %4 = tpu.iota {dimensions = array<i32: 1>} : vector<8x16xi32>
    %5 = vector.broadcast %1 : vector<8x1xi32> to vector<8x16xi32>
    %6 = arith.cmpi eq, %4, %5 : vector<8x16xi32>
    %cst = arith.constant dense<0xFF800000> : vector<8xf32>
    %7 = vector.multi_reduction <maximumf>, %0, %cst [1] : vector<8x16xf32> to vector<8xf32>
    %8 = vector.shape_cast %7 : vector<8xf32> to vector<8x1xf32>
    %9 = vector.broadcast %8 : vector<8x1xf32> to vector<8x16xf32>
    %10 = arith.subf %0, %9 : vector<8x16xf32>
    %11 = math.exp %10 : vector<8x16xf32>
    %cst_7 = arith.constant dense<0.000000e+00> : vector<8xf32>
    %12 = vector.multi_reduction <add>, %11, %cst_7 [1] : vector<8x16xf32> to vector<8xf32>
    %13 = vector.shape_cast %12 : vector<8xf32> to vector<8x1xf32>
    %cst_8 = arith.constant 0.000000e+00 : f32
    %14 = vector.broadcast %cst_8 : f32 to vector<8x16xf32>
    %15 = arith.select %6, %10, %14 : vector<8x16xi1>, vector<8x16xf32>
    %cst_9 = arith.constant dense<0.000000e+00> : vector<8xf32>
    %16 = vector.multi_reduction <add>, %15, %cst_9 [1] : vector<8x16xf32> to vector<8xf32>
    %17 = vector.shape_cast %16 : vector<8xf32> to vector<8x1xf32>
    %18 = math.log %13 : vector<8x1xf32>
    %19 = arith.subf %18, %17 : vector<8x1xf32>
    %cst_10 = arith.constant 0.000000e+00 : f32
    %20 = vector.shape_cast %3 : vector<1x16xf32> to vector<1x16xf32>
    %21 = vector.broadcast %20 : vector<1x16xf32> to vector<8x16xf32>
    %22 = vector.broadcast %cst_10 : f32 to vector<8x16xf32>
    %23 = arith.select %6, %21, %22 : vector<8x16xi1>, vector<8x16xf32>
    %cst_11 = arith.constant dense<0.000000e+00> : vector<8xf32>
    %24 = vector.multi_reduction <add>, %23, %cst_11 [1] : vector<8x16xf32> to vector<8xf32>
    %25 = vector.shape_cast %24 : vector<8xf32> to vector<8x1xf32>
    %c8_i32 = arith.constant 8 : i32
    %26 = arith.muli %arg0, %c8_i32 : i32
    %27 = tpu.iota {dimensions = array<i32: 0>} : vector<8x1xi32>
    %28 = vector.broadcast %26 : i32 to vector<8x1xi32>
    %29 = arith.addi %28, %27 : vector<8x1xi32>
    %c8_i32_12 = arith.constant 8 : i32
    %30 = vector.broadcast %c8_i32_12 : i32 to vector<8x1xi32>
    %31 = arith.cmpi slt, %29, %30 : vector<8x1xi32>
    %cst_13 = arith.constant 0.000000e+00 : f32
    %32 = vector.broadcast %cst_13 : f32 to vector<8x1xf32>
    %33 = arith.cmpf one, %2, %32 : vector<8x1xf32>
    %34 = arith.andi %31, %33 : vector<8x1xi1>
    %35 = arith.mulf %25, %19 : vector<8x1xf32>
    %cst_14 = arith.constant 0.000000e+00 : f32
    %36 = vector.broadcast %cst_14 : f32 to vector<8x1xf32>
    %37 = arith.select %34, %35, %36 : vector<8x1xi1>, vector<8x1xf32>
    %38 = vector.shape_cast %37 : vector<8x1xf32> to vector<1x8x1xf32>
    %cst_15 = arith.constant dense<0.000000e+00> : vector<1xf32>
    %39 = vector.multi_reduction <add>, %38, %cst_15 [1, 2] : vector<1x8x1xf32> to vector<1xf32>
    %40 = vector.shape_cast %39 : vector<1xf32> to vector<1x1x1xf32>
    %41 = vector.extract %40[0, 0, 0] : f32 from vector<1x1x1xf32>
    %cst_16 = arith.constant 0.000000e+00 : f32
    %42 = vector.broadcast %cst_16 : f32 to vector<8x1xf32>
    %43 = arith.select %34, %25, %42 : vector<8x1xi1>, vector<8x1xf32>
    %44 = vector.shape_cast %43 : vector<8x1xf32> to vector<1x8x1xf32>
    %cst_17 = arith.constant dense<0.000000e+00> : vector<1xf32>
    %45 = vector.multi_reduction <add>, %44, %cst_17 [1, 2] : vector<1x8x1xf32> to vector<1xf32>
    %46 = vector.shape_cast %45 : vector<1xf32> to vector<1x1x1xf32>
    %47 = vector.extract %46[0, 0, 0] : f32 from vector<1x1x1xf32>
    %48 = tpu.iota {dimensions = array<i32: 0>} : vector<2x128xi32>
    %c0_i32 = arith.constant 0 : i32
    %49 = vector.broadcast %c0_i32 : i32 to vector<2x128xi32>
    %50 = arith.cmpi eq, %48, %49 : vector<2x128xi32>
    %51 = vector.broadcast %41 : f32 to vector<2x128xf32>
    %52 = vector.broadcast %47 : f32 to vector<2x128xf32>
    %53 = arith.select %50, %51, %52 : vector<2x128xi1>, vector<2x128xf32>
    %54 = vector.shape_cast %53 : vector<2x128xf32> to vector<1x2x128xf32>
    %c0_18 = arith.constant 0 : index
    %c0_19 = arith.constant 0 : index
    %c0_20 = arith.constant 0 : index
    %55 = vector.load %arg5[%c0_18, %c0_19, %c0_20] : memref<1x2x128xf32, #tpu.memory_space<vmem>>, vector<1x2x128xf32>
    tpu.vector_store %arg5[%c0_18, %c0_19, %c0_20], %54 {strides = array<i32>} : memref<1x2x128xf32, #tpu.memory_space<vmem>>, vector<1x2x128xf32>,
    return
  }
  func.func @transform_0(%arg0: i32) -> (i32, i32) {
    %c0_i32 = arith.constant 0 : i32
    %c0_i32_0 = arith.constant 0 : i32
    return %arg0, %c0_i32 : i32, i32
  }
  func.func @transform_1(%arg0: i32) -> (i32, i32) {
    %c0_i32 = arith.constant 0 : i32
    %c0_i32_0 = arith.constant 0 : i32
    return %arg0, %c0_i32 : i32, i32
  }
  func.func @transform_2(%arg0: i32) -> (i32, i32) {
    %c0_i32 = arith.constant 0 : i32
    %c0_i32_0 = arith.constant 0 : i32
    return %arg0, %c0_i32 : i32, i32
  }
  func.func @transform_3(%arg0: i32) -> (i32, i32) {
    %c0_i32 = arith.constant 0 : i32
    %c0_i32_0 = arith.constant 0 : i32
    %c0_i32_1 = arith.constant 0 : i32
    return %c0_i32, %c0_i32_0 : i32, i32
  }
  func.func @transform_4(%arg0: i32) -> (i32, i32, i32) {
    %c0_i32 = arith.constant 0 : i32
    %c0_i32_0 = arith.constant 0 : i32
    %c0_i32_1 = arith.constant 0 : i32
    return %arg0, %c0_i32, %c0_i32_0 : i32, i32, i32
  }
}

</mosaic_0001>

<llo_original>
// kernel: masked_cross_entropy_loss.1
$region0: #{masked_cross_entropy_loss.1}
  #allocation0 [shape = 'u32[]', space=smem, size = 0x4, offset = 0x4, fixed_abs, tag = 'smem constant byte address 0x4 - core index']
  #allocation1 [shape = 'u32[72,128]{1,0:T(1,128)}', space=vmem, size = 0x9000, scoped, tag = 'internal scratch']
  %s0 = inlined_call_operand.vmem [shape: f32[8,16], index: 0, kind: input, shape index: {}]
  %s1 = inlined_call_operand.vmem [shape: s32[8,1], index: 1, kind: input, shape index: {}]
  %s2 = inlined_call_operand.vmem [shape: f32[8,1], index: 2, kind: input, shape index: {}]
  %s3 = inlined_call_operand.vmem [shape: f32[1,16], index: 3, kind: input, shape index: {}]
  %s4 = inlined_call_operand.vmem [shape: f32[1,2,128], index: 4, kind: output, shape index: {}]
  %s5 = sld [smem:[#allocation0]]
  $region26: #{masked_cross_entropy_loss.1} parent=0
    _
  %s7 = ssub.s32 1, %s5
  %s8 = scalar_select 0, %s7, %s5
  // Predicated region
  $region2: #{masked_cross_entropy_loss.1} parent=0 // pred_check
    _
  $region3: #{masked_cross_entropy_loss.1} parent=0 // pred_check_branch
    %10 = sbr.rel (0) target = $region5
  $region4: #{masked_cross_entropy_loss.1} parent=0 // pred_region
    _
  $region5: #{masked_cross_entropy_loss.1} parent=0 // pred_fallthru
    _
  // Predicated region
  $region6: #{masked_cross_entropy_loss.1} parent=0 // pred_check
    _
  $region7: #{masked_cross_entropy_loss.1} parent=0 // pred_check_branch
    %12 = sbr.rel (0) target = $region9
  $region8: #{masked_cross_entropy_loss.1} parent=0 // pred_region
    _
  $region9: #{masked_cross_entropy_loss.1} parent=0 // pred_fallthru
    _
  // Predicated region
  $region10: #{masked_cross_entropy_loss.1} parent=0 // pred_check
    _
  $region11: #{masked_cross_entropy_loss.1} parent=0 // pred_check_branch
    %14 = sbr.rel (0) target = $region13
  $region12: #{masked_cross_entropy_loss.1} parent=0 // pred_region
    _
  $region13: #{masked_cross_entropy_loss.1} parent=0 // pred_fallthru
    _
  // Predicated region
  $region14: #{masked_cross_entropy_loss.1} parent=0 // pred_check
    _
  $region15: #{masked_cross_entropy_loss.1} parent=0 // pred_check_branch
    %16 = sbr.rel (0) target = $region17
  $region16: #{masked_cross_entropy_loss.1} parent=0 // pred_region
    _
  $region17: #{masked_cross_entropy_loss.1} parent=0 // pred_fallthru
    _
  %v17 = vld [vmem:[%s0] sm:$0xff]
  %v18 = vld [vmem:[%s1] sm:$0xff]
  %v19 = vld [vmem:[%s2] sm:$0xff]
  %v20 = vld [vmem:[%s3] sm:$0x1]
  %v21 = vlaneseq
  %v22 = vand.u32 %v21, 127
  %23 = vset.pattern.permute.xlu0 0
  %24 = vperm.xlu0 %23, %v18
  %v25 = vpop.permute.xlu0 %24
  %vm26 = vcmp.eq.s32.totalorder %v22, %v25
  %vm27 = vcmask 130048
  %v28 = vsel %vm27, %v17, -inf
  %29 = vmax.xlane.f32.xlu0 %v28
  %v30 = vpop.xlane.xlu0 %29
  %v31 = vsub.f32 %v17, %v30
  %v32 = vmul.f32 %v31, 1.442695
  %v33 = vpow.pop %v32
  %v34 = vsel %vm27, %v33, 0.0
  %35 = vadd.xlane.f32.xlu0 %v34
  %v36 = vpop.xlane.xlu0 %35
  %v37 = vsel %vm26, %v31, 0.0
  %v38 = vsel %vm27, %v37, 0.0
  %39 = vadd.xlane.f32.xlu0 %v38
  %v40 = vpop.xlane.xlu0 %39
  %v41 = vlog2.pop %v36
  %v42 = vmul.f32 %v41, 0.6931472
  %v43 = vsub.f32 %v42, %v40
  %v45 = vperm.slane %v20, 0
  %v47 = vsel %vm26, %v45, 0.0
  %v48 = vsel %vm27, %v47, 0.0
  %49 = vadd.xlane.f32.xlu0 %v48
  %v50 = vpop.xlane.xlu0 %49
  %s51 = smul.u32 0, 8
  %v52 = vlaneseq
  %v53 = vshrl.u32 %v52, 7
  %v54 = vstv %s51
  %v55 = vadd.s32 %v54, %v53
  %vm56 = vcmp.lt.s32.totalorder %v55, 8
  %vm57 = vcmp.ne.f32.partialorder %v19, 0.0
  %vm58 = vmand %vm56, %vm57
  %v59 = vmul.f32 %v50, %v43
  %v60 = vsel %vm58, %v59, 0.0
  %vm61 = vcmask 7168
  %v62 = vsel %vm61, %v60, 0.0
  %63 = vadd.xlane.f32.xlu0 %v62
  %v64 = vpop.xlane.xlu0 %63
  %v65 = vrot.slane %v64, 4
  %v66 = vadd.f32 %v64, %v65
  %v67 = vrot.slane %v66, 2
  %v68 = vadd.f32 %v66, %v67
  %v69 = vrot.slane %v68, 1
  %v70 = vadd.f32 %v68, %v69
  %s71 = vtos %v70
  %v72 = vsel %vm58, %v50, 0.0
  %v73 = vsel %vm61, %v72, 0.0
  %74 = vadd.xlane.f32.xlu0 %v73
  %v75 = vpop.xlane.xlu0 %74
  %v76 = vrot.slane %v75, 4
  %v77 = vadd.f32 %v75, %v76
  %v78 = vrot.slane %v77, 2
  %v79 = vadd.f32 %v77, %v78
  %v80 = vrot.slane %v79, 1
  %v81 = vadd.f32 %v79, %v80
  %s82 = vtos %v81
  %vm83 = vcmp.eq.s32.totalorder %v53, 0
  %v84 = vstv %s71
  %v85 = vstv %s82
  %v86 = vsel %vm83, %v84, %v85
  %87 = vst [vmem:[%s4] sm:$0x3] %v86
  // Predicated region
  $region18: #{masked_cross_entropy_loss.1} parent=0 // pred_check
    _
  $region19: #{masked_cross_entropy_loss.1} parent=0 // pred_check_branch
    %89 = sbr.rel (0) target = $region21
  $region20: #{masked_cross_entropy_loss.1} parent=0 // pred_region
    _
  $region21: #{masked_cross_entropy_loss.1} parent=0 // pred_fallthru
    _
  // Predicated region
  $region22: #{masked_cross_entropy_loss.1} parent=0 // pred_check
    _
  $region23: #{masked_cross_entropy_loss.1} parent=0 // pred_check_branch
    %91 = sbr.rel (0) target = $region25
  $region24: #{masked_cross_entropy_loss.1} parent=0 // pred_region
    _
  $region25: #{masked_cross_entropy_loss.1} parent=0 // pred_fallthru
    _

</llo_original>
